<compile_context>
chip_gen: v7x
topology: tpu7x:2x2x1
jax: 0.10.0
libtpu: 0.0.40
codegen_flags: <defaults>
</compile_context>

<pallas_src>
import functools

import jax
import jax.numpy as jnp
from jax.experimental import pallas as pl
from jax.experimental.pallas import tpu as pltpu

DIM_EMBED = 32
DIM_FF = 32
LANE = 128
PACK = LANE // DIM_EMBED   # 4 original rows packed per 128-lane row
SUBLANE = 16               # row-tile granularity (covers f32 (8) and bf16 (16))


def ffn_kernel(x_ref, w1_ref, b1_ref, w2_ref, b2_ref, o_ref):
    # bf16 MXU operands, f32 accumulation; biases/ReLU in f32 on the VPU.
    x = x_ref[...].astype(jnp.bfloat16)
    h = jnp.dot(x, w1_ref[...], preferred_element_type=jnp.float32) + b1_ref[...]
    h = jnp.maximum(h, 0.0).astype(jnp.bfloat16)
    y = jnp.dot(h, w2_ref[...], preferred_element_type=jnp.float32) + b2_ref[...]
    o_ref[...] = y.astype(o_ref.dtype)


def pack_params(w1, b1, w2, b2):
    """One-time weight preprocessing (hoisted out of the per-call hot path)."""
    assert w1.shape == (DIM_EMBED, DIM_FF) and w2.shape == (DIM_FF, DIM_EMBED)
    assert b1.shape == (DIM_FF,) and b2.shape == (DIM_EMBED,)
    eye = jnp.eye(PACK, dtype=jnp.float32)
    # Block-diagonal 128x128 weights (off-diagonal zeros => same math),
    # stored in bf16 for the MXU; biases tiled lane-dense, kept in f32.
    w1p = jnp.kron(eye, w1.astype(jnp.float32)).astype(jnp.bfloat16)
    w2p = jnp.kron(eye, w2.astype(jnp.float32)).astype(jnp.bfloat16)
    b1p = jnp.tile(b1.astype(jnp.float32), PACK).reshape(1, LANE)
    b2p = jnp.tile(b2.astype(jnp.float32), PACK).reshape(1, LANE)
    return {"w1": w1, "b1": b1, "w2": w2, "b2": b2,
            "w1p": w1p, "b1p": b1p, "w2p": w2p, "b2p": b2p}


@functools.partial(jax.jit, static_argnames=("tm", "min_rows_for_pallas"))
def feed_forward(x, params, *, tm=8192, min_rows_for_pallas=2048):
    """x: (..., DIM_EMBED) -> (..., DIM_EMBED). tm = row tile in PACKED rows."""
    lead_shape = x.shape[:-1]
    assert x.shape[-1] == DIM_EMBED
    x2d = x.reshape(-1, DIM_EMBED)
    M = x2d.shape[0]

    if M < min_rows_for_pallas:
        # Small-M fallback: pallas_call fixed overhead dominates here.
        h = jnp.dot(x2d.astype(jnp.bfloat16), params["w1"].astype(jnp.bfloat16),
                    preferred_element_type=jnp.float32) + params["b1"].astype(jnp.float32)
        h = jnp.maximum(h, 0.0)
        y = jnp.dot(h.astype(jnp.bfloat16), params["w2"].astype(jnp.bfloat16),
                    preferred_element_type=jnp.float32) + params["b2"].astype(jnp.float32)
        return y.astype(x.dtype).reshape(*lead_shape, DIM_EMBED)

    # Pad only up to a multiple of PACK (<= 3 rows, and only when needed).
    m_packable = pl.cdiv(M, PACK) * PACK
    if m_packable != M:
        x2d = jnp.pad(x2d, ((0, m_packable - M), (0, 0)))
    mp = m_packable // PACK
    x_packed = x2d.reshape(mp, LANE)          # lane-dense input (free reshape)

    # Row tile: big (amortizes per-step cost), multiple of 16 sublanes, and
    # split into >= 2 grid steps so both v7x TensorCores get work.  The ragged
    # last block (if any) is handled by the pipeline (OOB stores masked).
    if mp <= SUBLANE:
        tm_p = mp                              # single full-array block
    else:
        tm_p = min(tm, pl.cdiv(mp, 2))
        tm_p = max(SUBLANE, pl.cdiv(tm_p, SUBLANE) * SUBLANE)
    grid = (pl.cdiv(mp, tm_p),)

    out_packed = pl.pallas_call(
        ffn_kernel,
        out_shape=jax.ShapeDtypeStruct((mp, LANE), x.dtype),
        grid_spec=pltpu.PrefetchScalarGridSpec(
            num_scalar_prefetch=0,
            grid=grid,
            in_specs=[
                pl.BlockSpec((tm_p, LANE), lambda i: (i, 0)),   # x rows (streamed)
                pl.BlockSpec((LANE, LANE), lambda i: (0, 0)),   # W1 (resident, bf16)
                pl.BlockSpec((1, LANE), lambda i: (0, 0)),      # b1 (resident, f32)
                pl.BlockSpec((LANE, LANE), lambda i: (0, 0)),   # W2 (resident, bf16)
                pl.BlockSpec((1, LANE), lambda i: (0, 0)),      # b2 (resident, f32)
            ],
            out_specs=pl.BlockSpec((tm_p, LANE), lambda i: (i, 0)),
        ),
        compiler_params=pltpu.CompilerParams(
            dimension_semantics=("parallel",),        # megacore-shardable on v7x
            vmem_limit_bytes=48 * 1024 * 1024,        # 2x dbl-buffered x+out + weights
        ),
    )(x_packed, params["w1p"], params["b1p"], params["w2p"], params["b2p"])

    out = out_packed.reshape(m_packable, DIM_EMBED)[:M]
    return out.reshape(*lead_shape, DIM_EMBED)


def init_params(key):
    # PyTorch nn.Linear default init: U(-1/sqrt(fan_in), 1/sqrt(fan_in)).
    k1, k2, k3, k4 = jax.random.split(key, 4)
    bound1 = 1.0 / jnp.sqrt(DIM_EMBED)
    bound2 = 1.0 / jnp.sqrt(DIM_FF)
    w1 = jax.random.uniform(k1, (DIM_EMBED, DIM_FF), jnp.float32, -bound1, bound1)
    b1 = jax.random.uniform(k2, (DIM_FF,), jnp.float32, -bound1, bound1)
    w2 = jax.random.uniform(k3, (DIM_FF, DIM_EMBED), jnp.float32, -bound2, bound2)
    b2 = jax.random.uniform(k4, (DIM_EMBED,), jnp.float32, -bound2, bound2)
    return w1, b1, w2, b2


if __name__ == "__main__":
    key = jax.random.PRNGKey(0)
    kx, kx2, kx3, kx4, kp = jax.random.split(key, 5)
    w1, b1, w2, b2 = init_params(kp)
    params = pack_params(w1, b1, w2, b2)     # preprocessing hoisted, done once

    def ref_fn(x):
        return jnp.maximum(x @ w1 + b1, 0.0) @ w2 + b2

    TOL = dict(atol=5e-2, rtol=5e-2)   # bf16 MXU operands vs. pure-f32 reference

    # 1) Small shape consistent with the module (batch=2, seq=8, hidden=32),
    #    forced through the Pallas kernel.
    x = jax.random.normal(kx, (2, 8, DIM_EMBED), jnp.float32)
    out = jax.block_until_ready(feed_forward(x, params, min_rows_for_pallas=0))
    assert out.shape == x.shape
    assert jnp.allclose(out, ref_fn(x), **TOL)

    # 2) Row count not a multiple of PACK exercises the (<=3-row) padding path.
    x2 = jax.random.normal(kx2, (3, 7, DIM_EMBED), jnp.float32)
    out2 = jax.block_until_ready(feed_forward(x2, params, min_rows_for_pallas=0))
    assert out2.shape == x2.shape
    assert jnp.allclose(out2, ref_fn(x2), **TOL)

    # 3) Multi-step grid with a ragged last block (default thresholds/Pallas path).
    x3 = jax.random.normal(kx3, (8, 600, DIM_EMBED), jnp.float32)
    out3 = jax.block_until_ready(feed_forward(x3, params))
    assert out3.shape == x3.shape
    assert jnp.allclose(out3, ref_fn(x3), **TOL)

    # 4) bf16 HBM I/O path (caller keeps activations in bf16 -> 2x bandwidth).
    x4 = jax.random.normal(kx4, (2, 256, DIM_EMBED), jnp.float32)
    x4_bf = x4.astype(jnp.bfloat16)
    out4 = jax.block_until_ready(feed_forward(x4_bf, params, min_rows_for_pallas=0))
    assert out4.dtype == jnp.bfloat16 and out4.shape == x4.shape
    assert jnp.allclose(out4.astype(jnp.float32),
                        ref_fn(x4_bf.astype(jnp.float32)), **TOL)

    # 5) Small-M XLA fallback (default threshold).
    out5 = jax.block_until_ready(feed_forward(x, params))
    assert jnp.allclose(out5, ref_fn(x), **TOL)

    print("KERNEL_OK")
</pallas_src>

<mosaic_0001>
module attributes {stable_mosaic.version = 11 : i64} {
  func.func @ffn_kernel(%arg0: i32, %arg1: memref<4x128xf32, #tpu.memory_space<vmem>>, %arg2: memref<128x128xbf16, #tpu.memory_space<vmem>>, %arg3: memref<1x128xf32, #tpu.memory_space<vmem>>, %arg4: memref<128x128xbf16, #tpu.memory_space<vmem>>, %arg5: memref<1x128xf32, #tpu.memory_space<vmem>>, %arg6: memref<4x128xf32, #tpu.memory_space<vmem>>) attributes {dimension_semantics = [#tpu.dimension_semantics<parallel>], iteration_bounds = array<i64: 1>, scalar_prefetch = 0 : i64, scratch_operands = 0 : i64, tpu.core_type = #tpu.core_type<tc>, window_params = [{transform_indices = @transform_0, window_bounds = array<i64: 4, 128>}, {pipeline_mode = #tpu.pipeline_mode<synchronous>, transform_indices = @transform_1, window_bounds = array<i64: 128, 128>}, {pipeline_mode = #tpu.pipeline_mode<synchronous>, transform_indices = @transform_2, window_bounds = array<i64: 1, 128>}, {pipeline_mode = #tpu.pipeline_mode<synchronous>, transform_indices = @transform_3, window_bounds = array<i64: 128, 128>}, {pipeline_mode = #tpu.pipeline_mode<synchronous>, transform_indices = @transform_4, window_bounds = array<i64: 1, 128>}, {transform_indices = @transform_5, window_bounds = array<i64: 4, 128>}]} {
    %c0 = arith.constant 0 : index
    %c0_0 = arith.constant 0 : index
    %0 = vector.load %arg1[%c0, %c0_0] : memref<4x128xf32, #tpu.memory_space<vmem>>, vector<4x128xf32>
    %1 = arith.truncf %0 : vector<4x128xf32> to vector<4x128xbf16>
    %c0_1 = arith.constant 0 : index
    %c0_2 = arith.constant 0 : index
    %2 = vector.load %arg2[%c0_1, %c0_2] : memref<128x128xbf16, #tpu.memory_space<vmem>>, vector<128x128xbf16>
    %cst = arith.constant dense<0.000000e+00> : vector<4x128xf32>
    %3 = tpu.matmul %1, %2, %cst {dimension_numbers = #tpu.dot_dimension_numbers<[1], [0], [0], [1], [0, 0, 1, 1], [], []>} : vector<4x128xbf16>, vector<128x128xbf16>, vector<4x128xf32> -> vector<4x128xf32>
    %c0_3 = arith.constant 0 : index
    %c0_4 = arith.constant 0 : index
    %4 = vector.load %arg3[%c0_3, %c0_4] : memref<1x128xf32, #tpu.memory_space<vmem>>, vector<1x128xf32>
    %5 = vector.broadcast %4 : vector<1x128xf32> to vector<4x128xf32>
    %6 = arith.addf %3, %5 : vector<4x128xf32>
    %cst_5 = arith.constant 0.000000e+00 : f32
    %7 = vector.broadcast %cst_5 : f32 to vector<4x128xf32>
    %8 = arith.maximumf %6, %7 : vector<4x128xf32>
    %9 = arith.truncf %8 : vector<4x128xf32> to vector<4x128xbf16>
    %c0_6 = arith.constant 0 : index
    %c0_7 = arith.constant 0 : index
    %10 = vector.load %arg4[%c0_6, %c0_7] : memref<128x128xbf16, #tpu.memory_space<vmem>>, vector<128x128xbf16>
    %cst_8 = arith.constant dense<0.000000e+00> : vector<4x128xf32>
    %11 = tpu.matmul %9, %10, %cst_8 {dimension_numbers = #tpu.dot_dimension_numbers<[1], [0], [0], [1], [0, 0, 1, 1], [], []>} : vector<4x128xbf16>, vector<128x128xbf16>, vector<4x128xf32> -> vector<4x128xf32>
    %c0_9 = arith.constant 0 : index
    %c0_10 = arith.constant 0 : index
    %12 = vector.load %arg5[%c0_9, %c0_10] : memref<1x128xf32, #tpu.memory_space<vmem>>, vector<1x128xf32>
    %13 = vector.broadcast %12 : vector<1x128xf32> to vector<4x128xf32>
    %14 = arith.addf %11, %13 : vector<4x128xf32>
    %c0_11 = arith.constant 0 : index
    %c0_12 = arith.constant 0 : index
    %15 = vector.load %arg6[%c0_11, %c0_12] : memref<4x128xf32, #tpu.memory_space<vmem>>, vector<4x128xf32>
    tpu.vector_store %arg6[%c0_11, %c0_12], %14 {strides = array<i32>} : memref<4x128xf32, #tpu.memory_space<vmem>>, vector<4x128xf32>,
    return
  }
  func.func @transform_0(%arg0: i32) -> (i32, i32) {
    %c0_i32 = arith.constant 0 : i32
    %c0_i32_0 = arith.constant 0 : i32
    return %arg0, %c0_i32 : i32, i32
  }
  func.func @transform_1(%arg0: i32) -> (i32, i32) {
    %c0_i32 = arith.constant 0 : i32
    %c0_i32_0 = arith.constant 0 : i32
    %c0_i32_1 = arith.constant 0 : i32
    return %c0_i32, %c0_i32_0 : i32, i32
  }
  func.func @transform_2(%arg0: i32) -> (i32, i32) {
    %c0_i32 = arith.constant 0 : i32
    %c0_i32_0 = arith.constant 0 : i32
    %c0_i32_1 = arith.constant 0 : i32
    return %c0_i32, %c0_i32_0 : i32, i32
  }
  func.func @transform_3(%arg0: i32) -> (i32, i32) {
    %c0_i32 = arith.constant 0 : i32
    %c0_i32_0 = arith.constant 0 : i32
    %c0_i32_1 = arith.constant 0 : i32
    return %c0_i32, %c0_i32_0 : i32, i32
  }
  func.func @transform_4(%arg0: i32) -> (i32, i32) {
    %c0_i32 = arith.constant 0 : i32
    %c0_i32_0 = arith.constant 0 : i32
    %c0_i32_1 = arith.constant 0 : i32
    return %c0_i32, %c0_i32_0 : i32, i32
  }
  func.func @transform_5(%arg0: i32) -> (i32, i32) {
    %c0_i32 = arith.constant 0 : i32
    %c0_i32_0 = arith.constant 0 : i32
    return %arg0, %c0_i32 : i32, i32
  }
}

</mosaic_0001>

<llo_original>
// kernel: feed_forward.1
$region0: #{feed_forward.1}
  #allocation0 [shape = 'u32[]', space=smem, size = 0x4, offset = 0x4, fixed_abs, tag = 'smem constant byte address 0x4 - core index']
  #allocation1 [shape = 'u32[144,128]{1,0:T(1,128)}', space=vmem, size = 0x12000, scoped, tag = 'internal scratch']
  %s0 = inlined_call_operand.vmem [shape: f32[4,128], index: 0, kind: input, shape index: {}]
  %s1 = inlined_call_operand.hbm [shape: bf16[128,128], index: 1, kind: input, shape index: {}]
  %s2 = inlined_call_operand.vmem [shape: f32[1,128], index: 2, kind: input, shape index: {}]
  %s3 = inlined_call_operand.hbm [shape: bf16[128,128], index: 3, kind: input, shape index: {}]
  %s4 = inlined_call_operand.vmem [shape: f32[1,128], index: 4, kind: input, shape index: {}]
  %s5 = inlined_call_operand.vmem [shape: f32[4,128], index: 5, kind: output, shape index: {}]
  %s6 = sld [smem:[#allocation0]]
  $region38: #{feed_forward.1} parent=0
    _
  %s8 = ssub.s32 1, %s6
  %s9 = scalar_select 0, %s8, %s6
  $region1: #{feed_forward.1} parent=0
    #allocation2 [shape = 'u8[32768]{0}', space=vmem, size = 0x8000, scoped, tag = 'input window, operand 1, single buffered']
    #allocation3 [shape = 's32[1]{0}', space=sflag, size = 0x4, scoped, tag = 'scoped memory for feed_forward.1']
    #allocation4 [shape = 'u8[32768]{0}', space=vmem, size = 0x8000, scoped, tag = 'input window, operand 3, single buffered']
    #allocation5 [shape = 's32[1]{0}', space=sflag, size = 0x4, scoped, tag = 'scoped memory for feed_forward.1']
    %10 = vsyncpa [#allocation3], 0
    %11 = vsyncpa [#allocation5], 0
    // Predicated region
    $region2: #{feed_forward.1} parent=1 // pred_check
      _
    $region3: #{feed_forward.1} parent=1 // pred_check_branch
      %13 = sbr.rel (0) target = $region5
    $region4: #{feed_forward.1} parent=1 // pred_region
      _
    $region5: #{feed_forward.1} parent=1 // pred_fallthru
      _
    // Predicated region
    $region6: #{feed_forward.1} parent=1 // pred_check
      _
    $region7: #{feed_forward.1} parent=1 // pred_check_branch
      %15 = sbr.rel (0) target = $region9
    $region8: #{feed_forward.1} parent=1 // pred_region
      %s17 = ssub.s32 1024, 1024
      %18 = vsyncadd [#allocation3], %s17
      %s19 = sshll.u32 [#allocation2], 4
      %s20 = int_to_ptr.vmem [resolvable:$true] %s19
      %25 = dma.hbm_to_vmem [thread:$0]  %s1, 1024, %s20, [#allocation3], 64, 64, 4
    $region9: #{feed_forward.1} parent=1 // pred_fallthru
      _
    // Predicated region
    $region10: #{feed_forward.1} parent=1 // pred_check
      _
    $region11: #{feed_forward.1} parent=1 // pred_check_branch
      %27 = sbr.rel (0) target = $region13
    $region12: #{feed_forward.1} parent=1 // pred_region
      _
    $region13: #{feed_forward.1} parent=1 // pred_fallthru
      _
    // Predicated region
    $region14: #{feed_forward.1} parent=1 // pred_check
      _
    $region15: #{feed_forward.1} parent=1 // pred_check_branch
      %29 = sbr.rel (0) target = $region17
    $region16: #{feed_forward.1} parent=1 // pred_region
      %s31 = ssub.s32 1024, 1024
      %32 = vsyncadd [#allocation5], %s31
      %s33 = sshll.u32 [#allocation4], 4
      %s34 = int_to_ptr.vmem [resolvable:$true] %s33
      %39 = dma.hbm_to_vmem [thread:$0]  %s3, 1024, %s34, [#allocation5], 64, 64, 4
    $region17: #{feed_forward.1} parent=1 // pred_fallthru
      _
    // Predicated region
    $region18: #{feed_forward.1} parent=1 // pred_check
      _
    $region19: #{feed_forward.1} parent=1 // pred_check_branch
      %41 = sbr.rel (0) target = $region21
    $region20: #{feed_forward.1} parent=1 // pred_region
      _
    $region21: #{feed_forward.1} parent=1 // pred_fallthru
      _
    // Predicated region
    $region22: #{feed_forward.1} parent=1 // pred_check
      _
    $region23: #{feed_forward.1} parent=1 // pred_check_branch
      %43 = sbr.rel (0) target = $region25
    $region24: #{feed_forward.1} parent=1 // pred_region
      %44 = dma.done [#allocation3], 1024
    $region25: #{feed_forward.1} parent=1 // pred_fallthru
      _
    // Predicated region
    $region26: #{feed_forward.1} parent=1 // pred_check
      _
    $region27: #{feed_forward.1} parent=1 // pred_check_branch
      %46 = sbr.rel (0) target = $region29
    $region28: #{feed_forward.1} parent=1 // pred_region
      %47 = dma.done [#allocation5], 1024
    $region29: #{feed_forward.1} parent=1 // pred_fallthru
      _
    %v49 = vld [vmem:[%s0] sm:$0xf]
    %v50 = vpack.c.bf16 %v49, %v49
    %v51 = vld [vmem:[#allocation2] sm:$0xf]
    %v52 = vld [vmem:[#allocation2 + $0x4] sm:$0xf]
    %v53 = vld [vmem:[#allocation2 + $0x8] sm:$0xf]
    %v54 = vld [vmem:[#allocation2 + $0xc] sm:$0xf]
    %v55 = vld [vmem:[#allocation2 + $0x10] sm:$0xf]
    %v56 = vld [vmem:[#allocation2 + $0x14] sm:$0xf]
    %v57 = vld [vmem:[#allocation2 + $0x18] sm:$0xf]
    %v58 = vld [vmem:[#allocation2 + $0x1c] sm:$0xf]
    %v59 = vld [vmem:[#allocation2 + $0x20] sm:$0xf]
    %v60 = vld [vmem:[#allocation2 + $0x24] sm:$0xf]
    %v61 = vld [vmem:[#allocation2 + $0x28] sm:$0xf]
    %v62 = vld [vmem:[#allocation2 + $0x2c] sm:$0xf]
    %v63 = vld [vmem:[#allocation2 + $0x30] sm:$0xf]
    %v64 = vld [vmem:[#allocation2 + $0x34] sm:$0xf]
    %v65 = vld [vmem:[#allocation2 + $0x38] sm:$0xf]
    %v66 = vld [vmem:[#allocation2 + $0x3c] sm:$0xf]
    %v67 = vld [vmem:[%s2] sm:$0x1]
    %v69 = vlaneseq
    %v70 = vshrl.u32 %v69, 7
    %v71 = vsub.s32 0, %v70
    %v72 = vrot.slane %v67, %v71
    %v90 = vunpack.c.l.b16 %v51
    %v91 = vunpack.c.l.b16 %v52
    %v92 = vunpack.c.l.b16 %v53
    %v93 = vunpack.c.l.b16 %v54
    %v94 = vunpack.c.l.b16 %v55
    %v95 = vunpack.c.l.b16 %v56
    %v96 = vunpack.c.l.b16 %v57
    %v97 = vunpack.c.l.b16 %v58
    %v98 = vunpack.c.l.b16 %v59
    %v99 = vunpack.c.l.b16 %v60
    %v100 = vunpack.c.l.b16 %v61
    %v101 = vunpack.c.l.b16 %v62
    %v102 = vunpack.c.l.b16 %v63
    %v103 = vunpack.c.l.b16 %v64
    %v104 = vunpack.c.l.b16 %v65
    %v105 = vunpack.c.l.b16 %v66
    %v106 = vpack.c.b16 %v91, %v90
    %v107 = vpack.c.b16 %v93, %v92
    %v108 = vpack.c.b16 %v95, %v94
    %v109 = vpack.c.b16 %v97, %v96
    %v110 = vpack.c.b16 %v99, %v98
    %v111 = vpack.c.b16 %v101, %v100
    %v112 = vpack.c.b16 %v103, %v102
    %v113 = vpack.c.b16 %v105, %v104
    %122 = vmatprep.subr.bf16.mxu0 0
    %123 = vmatpush1.bf16.msra.mxu0 %v106
    %124 = vmatprep.subr.bf16.mxu0 0
    %125 = vmatpush1.bf16.msra.mxu0 %v107
    %126 = vmatprep.subr.bf16.mxu0 0
    %127 = vmatpush1.bf16.msra.mxu0 %v108
    %128 = vmatprep.subr.bf16.mxu0 0
    %129 = vmatpush1.bf16.msra.mxu0 %v109
    %130 = vmatprep.subr.bf16.mxu0 0
    %131 = vmatpush1.bf16.msra.mxu0 %v110
    %132 = vmatprep.subr.bf16.mxu0 0
    %133 = vmatpush1.bf16.msra.mxu0 %v111
    %134 = vmatprep.subr.bf16.mxu0 0
    %135 = vmatpush1.bf16.msra.mxu0 %v112
    %136 = vmatprep.subr.bf16.mxu0 0
    %137 = vmatpush1.bf16.msra.mxu0 %v113
    %138 = vmatprep.subr.bf16.mxu0 0
    %139 = vmatpush1.bf16.msra.mxu0 0
    %140 = vmatprep.subr.bf16.mxu0 0
    %141 = vmatpush1.bf16.msra.mxu0 0
    %142 = vmatprep.subr.bf16.mxu0 0
    %143 = vmatpush1.bf16.msra.mxu0 0
    %144 = vmatprep.subr.bf16.mxu0 0
    %145 = vmatpush1.bf16.msra.mxu0 0
    %146 = vmatprep.subr.bf16.mxu0 0
    %147 = vmatpush1.bf16.msra.mxu0 0
    %148 = vmatprep.subr.bf16.mxu0 0
    %149 = vmatpush1.bf16.msra.mxu0 0
    %150 = vmatprep.subr.bf16.mxu0 0
    %151 = vmatpush1.bf16.msra.mxu0 0
    %152 = vmatprep.subr.bf16.mxu0 0
    %153 = vmatpush1.bf16.msra.mxu0 0
    %154 = vmatprep.mubr.bf16.mxu0 0
    %155 = vmatmul.mubr.bf16.gmra.mrb[0].mxu0 %v50
    %v156 = vpop.f32.mrb[0].mxu0
    %v157 = vadd.f32 %v72, %v156
    %v158 = vpop.f32.mrb[0].mxu0
    %v159 = vpop.f32.mrb[0].mxu0
    %v160 = vpop.f32.mrb[0].mxu0
    %161 = vdwg.mxu0
    %v162 = vmax.f32 %v157, 0.0
    %v163 = vpack.c.bf16 %v162, %v162
    %v164 = vld [vmem:[#allocation4] sm:$0xf]
    %v165 = vld [vmem:[#allocation4 + $0x4] sm:$0xf]
    %v166 = vld [vmem:[#allocation4 + $0x8] sm:$0xf]
    %v167 = vld [vmem:[#allocation4 + $0xc] sm:$0xf]
    %v168 = vld [vmem:[#allocation4 + $0x10] sm:$0xf]
    %v169 = vld [vmem:[#allocation4 + $0x14] sm:$0xf]
    %v170 = vld [vmem:[#allocation4 + $0x18] sm:$0xf]
    %v171 = vld [vmem:[#allocation4 + $0x1c] sm:$0xf]
    %v172 = vld [vmem:[#allocation4 + $0x20] sm:$0xf]
    %v173 = vld [vmem:[#allocation4 + $0x24] sm:$0xf]
    %v174 = vld [vmem:[#allocation4 + $0x28] sm:$0xf]
    %v175 = vld [vmem:[#allocation4 + $0x2c] sm:$0xf]
    %v176 = vld [vmem:[#allocation4 + $0x30] sm:$0xf]
    %v177 = vld [vmem:[#allocation4 + $0x34] sm:$0xf]
    %v178 = vld [vmem:[#allocation4 + $0x38] sm:$0xf]
    %v179 = vld [vmem:[#allocation4 + $0x3c] sm:$0xf]
    %v180 = vld [vmem:[%s4] sm:$0x1]
    %v182 = vlaneseq
    %v183 = vshrl.u32 %v182, 7
    %v184 = vsub.s32 0, %v183
    %v185 = vrot.slane %v180, %v184
    %v203 = vunpack.c.l.b16 %v164
    %v204 = vunpack.c.l.b16 %v165
    %v205 = vunpack.c.l.b16 %v166
    %v206 = vunpack.c.l.b16 %v167
    %v207 = vunpack.c.l.b16 %v168
    %v208 = vunpack.c.l.b16 %v169
    %v209 = vunpack.c.l.b16 %v170
    %v210 = vunpack.c.l.b16 %v171
    %v211 = vunpack.c.l.b16 %v172
    %v212 = vunpack.c.l.b16 %v173
    %v213 = vunpack.c.l.b16 %v174
    %v214 = vunpack.c.l.b16 %v175
    %v215 = vunpack.c.l.b16 %v176
    %v216 = vunpack.c.l.b16 %v177
    %v217 = vunpack.c.l.b16 %v178
    %v218 = vunpack.c.l.b16 %v179
    %v219 = vpack.c.b16 %v204, %v203
    %v220 = vpack.c.b16 %v206, %v205
    %v221 = vpack.c.b16 %v208, %v207
    %v222 = vpack.c.b16 %v210, %v209
    %v223 = vpack.c.b16 %v212, %v211
    %v224 = vpack.c.b16 %v214, %v213
    %v225 = vpack.c.b16 %v216, %v215
    %v226 = vpack.c.b16 %v218, %v217
    %235 = vmatprep.subr.bf16.mxu0 0
    %236 = vmatpush1.bf16.msra.mxu0 %v219
    %237 = vmatprep.subr.bf16.mxu0 0
    %238 = vmatpush1.bf16.msra.mxu0 %v220
    %239 = vmatprep.subr.bf16.mxu0 0
    %240 = vmatpush1.bf16.msra.mxu0 %v221
    %241 = vmatprep.subr.bf16.mxu0 0
    %242 = vmatpush1.bf16.msra.mxu0 %v222
    %243 = vmatprep.subr.bf16.mxu0 0
    %244 = vmatpush1.bf16.msra.mxu0 %v223
    %245 = vmatprep.subr.bf16.mxu0 0
    %246 = vmatpush1.bf16.msra.mxu0 %v224
    %247 = vmatprep.subr.bf16.mxu0 0
    %248 = vmatpush1.bf16.msra.mxu0 %v225
    %249 = vmatprep.subr.bf16.mxu0 0
    %250 = vmatpush1.bf16.msra.mxu0 %v226
    %251 = vmatprep.subr.bf16.mxu0 0
    %252 = vmatpush1.bf16.msra.mxu0 0
    %253 = vmatprep.subr.bf16.mxu0 0
    %254 = vmatpush1.bf16.msra.mxu0 0
    %255 = vmatprep.subr.bf16.mxu0 0
    %256 = vmatpush1.bf16.msra.mxu0 0
    %257 = vmatprep.subr.bf16.mxu0 0
    %258 = vmatpush1.bf16.msra.mxu0 0
    %259 = vmatprep.subr.bf16.mxu0 0
    %260 = vmatpush1.bf16.msra.mxu0 0
    %261 = vmatprep.subr.bf16.mxu0 0
    %262 = vmatpush1.bf16.msra.mxu0 0
    %263 = vmatprep.subr.bf16.mxu0 0
    %264 = vmatpush1.bf16.msra.mxu0 0
    %265 = vmatprep.subr.bf16.mxu0 0
    %266 = vmatpush1.bf16.msra.mxu0 0
    %267 = vmatprep.mubr.bf16.mxu0 0
    %268 = vmatmul.mubr.bf16.gmra.mrb[0].mxu0 %v163
    %v269 = vpop.f32.mrb[0].mxu0
    %v270 = vadd.f32 %v185, %v269
    %v271 = vpop.f32.mrb[0].mxu0
    %v272 = vpop.f32.mrb[0].mxu0
    %v273 = vpop.f32.mrb[0].mxu0
    %274 = vdwg.mxu0
    %275 = vst [vmem:[%s5] sm:$0xf] %v270
    // Predicated region
    $region30: #{feed_forward.1} parent=1 // pred_check
      _
    $region31: #{feed_forward.1} parent=1 // pred_check_branch
      %277 = sbr.rel (0) target = $region33
    $region32: #{feed_forward.1} parent=1 // pred_region
      _
    $region33: #{feed_forward.1} parent=1 // pred_fallthru
      _
    // Predicated region
    $region34: #{feed_forward.1} parent=1 // pred_check
      _
    $region35: #{feed_forward.1} parent=1 // pred_check_branch
      %279 = sbr.rel (0) target = $region37
    $region36: #{feed_forward.1} parent=1 // pred_region
      _
    $region37: #{feed_forward.1} parent=1 // pred_fallthru
      _
    %280 = vsyncpa [#allocation3], 1
    %281 = vsyncpa [#allocation5], 1

</llo_original>
